<compile_context>
chip_gen: v6e
topology: v6e:2x2x1
jax: 0.10.0
libtpu: 0.0.40
codegen_flags: <defaults>
</compile_context>

<pallas_src>
import functools
import math

import jax
import jax.numpy as jnp
from jax import lax
from jax.experimental import pallas as pl
from jax.experimental.pallas import tpu as pltpu


def _round_up(a, b):
    return ((a + b - 1) // b) * b


# --------------------------------------------------------------------------
# 1) Fused QKV projection:  (M, C) @ (C, 3*hs) -> (M, 3*hs)
# --------------------------------------------------------------------------
def _qkv_proj_kernel(x_ref, w_ref, o_ref):
    o_ref[...] = jnp.dot(
        x_ref[...], w_ref[...], preferred_element_type=jnp.float32
    ).astype(o_ref.dtype)


def qkv_projection(x2d, w_qkv, *, tile_m=256):
    """x2d: (M, C); w_qkv: (C, 3*head_size).  Returns x2d @ w_qkv."""
    M, C = x2d.shape
    n_out = w_qkv.shape[1]

    # Fixed row tile (multiple of 8), sized so the grid has >= 2 steps when
    # possible (keeps both v7x TensorCores busy) and stays well inside VMEM.
    if M >= 16:
        tile_m = min(tile_m, max(8, _round_up(M // 2, 8)))
    else:
        tile_m = min(tile_m, _round_up(M, 8))
    m_pad = _round_up(M, tile_m)
    if m_pad != M:
        x2d = jnp.pad(x2d, ((0, m_pad - M), (0, 0)))

    out = pl.pallas_call(
        _qkv_proj_kernel,
        out_shape=jax.ShapeDtypeStruct((m_pad, n_out), x2d.dtype),
        grid_spec=pltpu.PrefetchScalarGridSpec(
            num_scalar_prefetch=0,
            grid=(m_pad // tile_m,),
            in_specs=[
                pl.BlockSpec((tile_m, C), lambda i: (i, 0)),   # x rows (pipelined)
                pl.BlockSpec((C, n_out), lambda i: (0, 0)),    # tiny weight, resident
            ],
            out_specs=pl.BlockSpec((tile_m, n_out), lambda i: (i, 0)),
        ),
        compiler_params=pltpu.CompilerParams(
            dimension_semantics=("parallel",),
            vmem_limit_bytes=32 * 1024 * 1024,
        ),
    )(x2d, w_qkv)
    return out[:M]


# --------------------------------------------------------------------------
# 2) Causal attention with online softmax (flash-style)
# --------------------------------------------------------------------------
def _causal_attn_kernel(q_ref, k_ref, v_ref, o_ref, m_sc, l_sc, acc_sc,
                        *, scale, tile_q, tile_k):
    qi = pl.program_id(1)
    ki = pl.program_id(2)

    @pl.when(ki == 0)
    def _():
        m_sc[...] = jnp.full_like(m_sc, -jnp.inf)
        l_sc[...] = jnp.zeros_like(l_sc)
        acc_sc[...] = jnp.zeros_like(acc_sc)

    q_start = qi * tile_q
    k_start = ki * tile_k

    # Skip KV tiles that lie entirely above the causal diagonal.
    @pl.when(k_start <= q_start + tile_q - 1)
    def _():
        # q_ref/k_ref/v_ref blocks are (1, tile, hs).
        s = jnp.einsum("bqd,bkd->bqk", q_ref[...], k_ref[...],
                       preferred_element_type=jnp.float32) * scale
        row = q_start + lax.broadcasted_iota(jnp.int32, (1, tile_q, tile_k), 1)
        col = k_start + lax.broadcasted_iota(jnp.int32, (1, tile_q, tile_k), 2)
        s = jnp.where(col <= row, s, -jnp.inf)

        m_prev = m_sc[...]
        m_new = jnp.maximum(m_prev, s.max(axis=-1, keepdims=True))
        alpha = jnp.exp(m_prev - m_new)
        p = jnp.exp(s - m_new)
        l_sc[...] = alpha * l_sc[...] + p.sum(axis=-1, keepdims=True)
        acc_sc[...] = alpha * acc_sc[...] + jnp.einsum(
            "bqk,bkd->bqd", p.astype(v_ref.dtype), v_ref[...],
            preferred_element_type=jnp.float32)
        m_sc[...] = m_new

    @pl.when(ki == pl.num_programs(2) - 1)
    def _():
        o_ref[...] = (acc_sc[...] / l_sc[...]).astype(o_ref.dtype)


def causal_attention(q, k, v, *, tile_q=128, tile_k=128):
    """q, k, v: (B, T, head_size).  Returns causal softmax(q k^T / sqrt(hs)) v."""
    B, T, hs = q.shape
    scale = float(hs) ** -0.5

    tile_q = min(tile_q, _round_up(T, 8))
    tile_k = min(tile_k, _round_up(T, 8))
    t_pad = _round_up(T, math.lcm(tile_q, tile_k))
    if t_pad != T:
        pad = ((0, 0), (0, t_pad - T), (0, 0))
        q = jnp.pad(q, pad)
        k = jnp.pad(k, pad)
        v = jnp.pad(v, pad)

    kernel = functools.partial(_causal_attn_kernel,
                               scale=scale, tile_q=tile_q, tile_k=tile_k)
    out = pl.pallas_call(
        kernel,
        out_shape=jax.ShapeDtypeStruct((B, t_pad, hs), q.dtype),
        grid_spec=pltpu.PrefetchScalarGridSpec(
            num_scalar_prefetch=0,
            grid=(B, t_pad // tile_q, t_pad // tile_k),
            in_specs=[
                pl.BlockSpec((1, tile_q, hs), lambda b, qi, ki: (b, qi, 0)),
                pl.BlockSpec((1, tile_k, hs), lambda b, qi, ki: (b, ki, 0)),
                pl.BlockSpec((1, tile_k, hs), lambda b, qi, ki: (b, ki, 0)),
            ],
            out_specs=pl.BlockSpec((1, tile_q, hs), lambda b, qi, ki: (b, qi, 0)),
            scratch_shapes=[
                pltpu.VMEM((1, tile_q, 1), jnp.float32),   # running max m
                pltpu.VMEM((1, tile_q, 1), jnp.float32),   # running sum l
                pltpu.VMEM((1, tile_q, hs), jnp.float32),  # accumulator
            ],
        ),
        compiler_params=pltpu.CompilerParams(
            dimension_semantics=("parallel", "parallel", "arbitrary"),
            vmem_limit_bytes=32 * 1024 * 1024,
        ),
    )(q, k, v)
    return out[:, :T, :]


# --------------------------------------------------------------------------
# Head forward:  matches the PyTorch module (weights stored as (in, out))
# --------------------------------------------------------------------------
def head_forward(x, w_key, w_query, w_value, *, tile_m=256, tile_q=128, tile_k=128):
    B, T, C = x.shape
    hs = w_key.shape[1]
    # Fuse the three bias-free projections into a single matmul.
    w_qkv = jnp.concatenate([w_query, w_key, w_value], axis=1)  # (C, 3*hs)
    qkv = qkv_projection(x.reshape(B * T, C), w_qkv, tile_m=tile_m)
    qkv = qkv.reshape(B, T, 3 * hs)
    q, k, v = qkv[..., :hs], qkv[..., hs:2 * hs], qkv[..., 2 * hs:]
    return causal_attention(q, k, v, tile_q=tile_q, tile_k=tile_k)


def head_reference(x, w_key, w_query, w_value):
    """Plain-JAX reference with the same math as the PyTorch module."""
    hs = w_key.shape[1]
    q = x @ w_query
    k = x @ w_key
    v = x @ w_value
    wei = jnp.einsum("btd,bsd->bts", q, k) * (hs ** -0.5)
    T = x.shape[1]
    mask = jnp.tril(jnp.ones((T, T), dtype=bool))
    wei = jnp.where(mask, wei, -jnp.inf)
    wei = jax.nn.softmax(wei, axis=-1)
    return jnp.einsum("bts,bsd->btd", wei, v)


if __name__ == "__main__":
    batch, seq = 2, 8
    n_embd, head_size = 384, 16

    key = jax.random.PRNGKey(0)
    kx, kk, kq, kv = jax.random.split(key, 4)
    x = jax.random.normal(kx, (batch, seq, n_embd), dtype=jnp.float32)

    # nn.Linear-style init (uniform +/- 1/sqrt(fan_in)), stored as (in, out)
    # so the kernel computes x @ W == torch's x @ W_t.T.
    bound = 1.0 / (n_embd ** 0.5)
    w_key = jax.random.uniform(kk, (n_embd, head_size), jnp.float32, -bound, bound)
    w_query = jax.random.uniform(kq, (n_embd, head_size), jnp.float32, -bound, bound)
    w_value = jax.random.uniform(kv, (n_embd, head_size), jnp.float32, -bound, bound)

    out = head_forward(x, w_key, w_query, w_value)
    out = jax.block_until_ready(out)

    ref = head_reference(x, w_key, w_query, w_value)
    assert out.shape == (batch, seq, head_size)
    assert jnp.allclose(out, ref, atol=1e-4, rtol=1e-4), float(
        jnp.max(jnp.abs(out - ref)))

    print("KERNEL_OK")
</pallas_src>

<mosaic_0001>
module attributes {stable_mosaic.version = 11 : i64} {
  func.func @_qkv_proj_kernel(%arg0: i32, %arg1: memref<8x384xf32, #tpu.memory_space<vmem>>, %arg2: memref<384x48xf32, #tpu.memory_space<vmem>>, %arg3: memref<8x48xf32, #tpu.memory_space<vmem>>) attributes {dimension_semantics = [#tpu.dimension_semantics<parallel>], iteration_bounds = array<i64: 2>, scalar_prefetch = 0 : i64, scratch_operands = 0 : i64, tpu.core_type = #tpu.core_type<tc>, window_params = [{transform_indices = @transform_0, window_bounds = array<i64: 8, 384>}, {pipeline_mode = #tpu.pipeline_mode<synchronous>, transform_indices = @transform_1, window_bounds = array<i64: 384, 48>}, {transform_indices = @transform_2, window_bounds = array<i64: 8, 48>}]} {
    %c0 = arith.constant 0 : index
    %c0_0 = arith.constant 0 : index
    %0 = vector.load %arg1[%c0, %c0_0] : memref<8x384xf32, #tpu.memory_space<vmem>>, vector<8x384xf32>
    %c0_1 = arith.constant 0 : index
    %c0_2 = arith.constant 0 : index
    %1 = vector.load %arg2[%c0_1, %c0_2] : memref<384x48xf32, #tpu.memory_space<vmem>>, vector<384x48xf32>
    %cst = arith.constant dense<0.000000e+00> : vector<8x48xf32>
    %2 = tpu.matmul %0, %1, %cst {dimension_numbers = #tpu.dot_dimension_numbers<[1], [0], [0], [1], [0, 0, 1, 1], [], []>} : vector<8x384xf32>, vector<384x48xf32>, vector<8x48xf32> -> vector<8x48xf32>
    %c0_3 = arith.constant 0 : index
    %c0_4 = arith.constant 0 : index
    %3 = vector.load %arg3[%c0_3, %c0_4] : memref<8x48xf32, #tpu.memory_space<vmem>>, vector<8x48xf32>
    tpu.vector_store %arg3[%c0_3, %c0_4], %2 {strides = array<i32>} : memref<8x48xf32, #tpu.memory_space<vmem>>, vector<8x48xf32>,
    return
  }
  func.func @transform_0(%arg0: i32) -> (i32, i32) {
    %c0_i32 = arith.constant 0 : i32
    %c0_i32_0 = arith.constant 0 : i32
    return %arg0, %c0_i32 : i32, i32
  }
  func.func @transform_1(%arg0: i32) -> (i32, i32) {
    %c0_i32 = arith.constant 0 : i32
    %c0_i32_0 = arith.constant 0 : i32
    %c0_i32_1 = arith.constant 0 : i32
    return %c0_i32, %c0_i32_0 : i32, i32
  }
  func.func @transform_2(%arg0: i32) -> (i32, i32) {
    %c0_i32 = arith.constant 0 : i32
    %c0_i32_0 = arith.constant 0 : i32
    return %arg0, %c0_i32 : i32, i32
  }
}

</mosaic_0001>

<llo_original>
// kernel: tpu_custom_call.1
$region0: #{tpu_custom_call.1}
  #allocation0 [shape = 'u32[]', space=smem, size = 0x4, offset = 0x4, fixed_abs, tag = 'smem constant byte address 0x4 - core index']
  #allocation1 [shape = 'u32[144,128]{1,0:T(1,128)}', space=vmem, size = 0x12000, scoped, tag = 'internal scratch']
  %s0 = inlined_call_operand.vmem [shape: f32[16,384], index: 0, kind: input, shape index: {}]
  %s1 = inlined_call_operand.vmem [shape: f32[384,48], index: 1, kind: input, shape index: {}]
  %s2 = inlined_call_operand.hbm [shape: f32[16,48], index: 2, kind: output, shape index: {}]
  %s3 = sld [smem:[#allocation0]]
  $region41: #{tpu_custom_call.1} parent=0
    _
  %s5 = ssub.s32 1, %s3
  %s6 = scalar_select 0, %s5, %s3
  $region1: #{tpu_custom_call.1} parent=0
    #allocation2 [shape = 'u8[8192]{0}', space=vmem, size = 0x2000, scoped, tag = 'output window, operand 0']
    #allocation3 [shape = 's32[2]{0}', space=sflag, size = 0x8, scoped, tag = 'scoped memory for tpu_custom_call.1']
    %7 = vsyncpa [#allocation3], 0
    %s8 = scalar_lea.sflag [#allocation3], 1
    %9 = vsyncpa %s8, 0
    loop: start=0, step=1, limit=4
    $region2: #{tpu_custom_call.1} parent=1 // loop_pre_header
      _
    $region3: #{tpu_custom_call.1} parent=1 // loop_header
      %s11 = sphi 0, %s15
      %p12 = scmp.ge.s32.totalorder %s11, 4
      %s21 = sphi 0, %s23
      %s24 = sphi 0, %s21
      %s25 = sphi 0, %s24
      %s41 = sphi 0, %s25
      %s45 = sphi 0, %s45
      %s47 = sphi 0, %s45
      %s48 = sphi 0, %s47
      %s62 = sphi 0, %s48
      %s68 = sphi 0, %s70
      %s71 = sphi 0, %s68
      %s72 = sphi 0, %s71
      %s88 = sphi 0, %s72
    $region4: #{tpu_custom_call.1} parent=1 // loop_header_branch
      %14 = sbr.rel (%p12) target = $region8
    $region5: #{tpu_custom_call.1} parent=1 // loop_body
      %s16 = ssub.s32 %s11, 1
      %s17 = ssub.s32 %s11, 2
      %s18 = sadd.s32 %s11, 1
      %s19 = ssub.s32 %s11, %s18
      %p20 = scmp.eq.s32.totalorder %s19, 0
      %s22 = sadd.s32 %s21, 1
      %s23 = scalar_select %p20, %s21, %s22
      %p26 = pneg %p20
      %p27 = scmp.eq.s32.totalorder %s11, 1
      %p28 = por %p26, %p27
      %p29 = scmp.ne.s32.totalorder %s21, %s24
      %p30 = scmp.eq.s32.totalorder %s11, 0
      %p31 = por %p29, %p30
      %p32 = scmp.ne.s32.totalorder %s21, %s24
      %p33 = scmp.eq.s32.totalorder %s16, 1
      %p34 = por %p32, %p33
      %p35 = scmp.ne.s32.totalorder %s24, %s25
      %p36 = scmp.eq.s32.totalorder %s16, 0
      %p37 = por %p35, %p36
      %p38 = scmp.ne.s32.totalorder %s24, %s25
      %p39 = scmp.eq.s32.totalorder %s17, 1
      %p40 = por %p38, %p39
      %p42 = scmp.ne.s32.totalorder %s25, %s41
      %p43 = scmp.eq.s32.totalorder %s17, 0
      %p44 = por %p42, %p43
      %s46 = sadd.s32 %s45, 1
      %p49 = scmp.eq.s32.totalorder %s11, 1
      %p50 = scmp.ne.s32.totalorder %s45, %s47
      %p51 = scmp.eq.s32.totalorder %s11, 0
      %p52 = por %p50, %p51
      %p53 = scmp.ne.s32.totalorder %s45, %s47
      %p54 = scmp.eq.s32.totalorder %s16, 1
      %p55 = por %p53, %p54
      %p56 = scmp.ne.s32.totalorder %s47, %s48
      %p57 = scmp.eq.s32.totalorder %s16, 0
      %p58 = por %p56, %p57
      %p59 = scmp.ne.s32.totalorder %s47, %s48
      %p60 = scmp.eq.s32.totalorder %s17, 1
      %p61 = por %p59, %p60
      %p63 = scmp.ne.s32.totalorder %s48, %s62
      %p64 = scmp.eq.s32.totalorder %s17, 0
      %p65 = por %p63, %p64
      %s66 = ssub.s32 %s11, %s18
      %p67 = scmp.eq.s32.totalorder %s66, 0
      %s69 = sadd.s32 %s68, 1
      %s70 = scalar_select %p67, %s68, %s69
      %p73 = pneg %p67
      %p74 = scmp.eq.s32.totalorder %s11, 1
      %p75 = por %p73, %p74
      %p76 = scmp.ne.s32.totalorder %s68, %s71
      %p77 = scmp.eq.s32.totalorder %s11, 0
      %p78 = por %p76, %p77
      %p79 = scmp.ne.s32.totalorder %s68, %s71
      %p80 = scmp.eq.s32.totalorder %s16, 1
      %p81 = por %p79, %p80
      %p82 = scmp.ne.s32.totalorder %s71, %s72
      %p83 = scmp.eq.s32.totalorder %s16, 0
      %p84 = por %p82, %p83
      %p85 = scmp.ne.s32.totalorder %s71, %s72
      %p86 = scmp.eq.s32.totalorder %s17, 1
      %p87 = por %p85, %p86
      %p89 = scmp.ne.s32.totalorder %s72, %s88
      %p90 = scmp.eq.s32.totalorder %s17, 0
      %p91 = por %p89, %p90
      %p92 = scmp.le.s32.totalorder 1, %s11
      %p93 = scmp.lt.s32.totalorder %s11, 3
      %p94 = pnand %p92, %p93
      %p95 = pneg %p94
      // Predicated region
      $region9: #{tpu_custom_call.1} parent=5 // pred_check
        _
      $region10: #{tpu_custom_call.1} parent=5 // pred_check_branch
        %97 = sbr.rel (%p94) target = $region12
      $region11: #{tpu_custom_call.1} parent=5 // pred_region
        %s98 = ssub.s32 %s11, 1
        // Predicated region
        $region13: #{tpu_custom_call.1} parent=11 // pred_check
          %p99 = pneg %p58
        $region14: #{tpu_custom_call.1} parent=11 // pred_check_branch
          %101 = sbr.rel (%p99) target = $region16
        $region15: #{tpu_custom_call.1} parent=11 // pred_region
          _
        $region16: #{tpu_custom_call.1} parent=11 // pred_fallthru
          _
      $region12: #{tpu_custom_call.1} parent=5 // pred_fallthru
        _
      %p102 = scmp.lt.s32.totalorder %s11, 2
      // Predicated region
      $region17: #{tpu_custom_call.1} parent=5 // pred_check
        %p103 = pneg %p102
      $region18: #{tpu_custom_call.1} parent=5 // pred_check_branch
        %105 = sbr.rel (%p103) target = $region20
      $region19: #{tpu_custom_call.1} parent=5 // pred_region
        // Predicated region
        $region21: #{tpu_custom_call.1} parent=19 // pred_check
          %p106 = pneg %p31
        $region22: #{tpu_custom_call.1} parent=19 // pred_check_branch
          %108 = sbr.rel (%p106) target = $region24
        $region23: #{tpu_custom_call.1} parent=19 // pred_region
          %p109 = scmp.lt.s32.totalorder %s11, 1
          %s110 = scalar_select %p109, %s11, 1
          %s111 = smul.addr %s110, 3
          %s112 = smul.addr %s111, 8
          %s113 = scalar_lea.vmem %s0, %s112
        $region24: #{tpu_custom_call.1} parent=19 // pred_fallthru
          _
      $region20: #{tpu_custom_call.1} parent=5 // pred_fallthru
        _
      %p114 = scmp.le.s32.totalorder 1, %s11
      %p115 = scmp.lt.s32.totalorder %s11, 3
      %p116 = pnand %p114, %p115
      %p117 = pneg %p116
      // Predicated region
      $region25: #{tpu_custom_call.1} parent=5 // pred_check
        _
      $region26: #{tpu_custom_call.1} parent=5 // pred_check_branch
        %119 = sbr.rel (%p116) target = $region28
      $region27: #{tpu_custom_call.1} parent=5 // pred_region
        %s120 = ssub.s32 %s11, 1
        %p121 = scmp.lt.s32.totalorder %s16, 1
        %s122 = scalar_select %p121, %s16, 1
        %s123 = smul.addr %s122, 3
        %s124 = smul.addr %s123, 8
        %s125 = scalar_lea.vmem %s0, %s124
        %p126 = pneg %p37
        %p127 = pneg %p34
        %p128 = pneg %p58
        %p129 = pneg %p55
        %p130 = pneg %p84
        %p131 = pneg %p81
        %s132 = sand.u32 %s71, 1
        %s133 = scalar_lea.sflag [#allocation3], %s132
        %s134 = sand.u32 %s71, 1
        %s135 = smul.addr %s134, 8
        %s136 = scalar_lea.vmem [#allocation2], %s135
        %p137 = scmp.lt.s32.totalorder %s16, 1
        %s138 = scalar_select %p137, %s16, 1
        %s139 = smul.addr %s138, 3
        %s140 = smul.addr %s139, 8
        %s141 = scalar_lea.vmem %s0, %s140
        %v142 = vld [vmem:[%s141] sm:$0xff]
        %v143 = vld [vmem:[%s141 + $0x8] sm:$0xff]
        %v144 = vld [vmem:[%s141 + $0x10] sm:$0xff]
        %v145 = vld [vmem:[%s1] sm:$0xff]
        %v146 = vld [vmem:[%s1 + $0x8] sm:$0xff]
        %v147 = vld [vmem:[%s1 + $0x10] sm:$0xff]
        %v148 = vld [vmem:[%s1 + $0x18] sm:$0xff]
        %v149 = vld [vmem:[%s1 + $0x20] sm:$0xff]
        %v150 = vld [vmem:[%s1 + $0x28] sm:$0xff]
        %v151 = vld [vmem:[%s1 + $0x30] sm:$0xff]
        %v152 = vld [vmem:[%s1 + $0x38] sm:$0xff]
        %v153 = vld [vmem:[%s1 + $0x40] sm:$0xff]
        %v154 = vld [vmem:[%s1 + $0x48] sm:$0xff]
        %v155 = vld [vmem:[%s1 + $0x50] sm:$0xff]
        %v156 = vld [vmem:[%s1 + $0x58] sm:$0xff]
        %v157 = vld [vmem:[%s1 + $0x60] sm:$0xff]
        %v158 = vld [vmem:[%s1 + $0x68] sm:$0xff]
        %v159 = vld [vmem:[%s1 + $0x70] sm:$0xff]
        %v160 = vld [vmem:[%s1 + $0x78] sm:$0xff]
        %v161 = vld [vmem:[%s1 + $0x80] sm:$0xff]
        %v162 = vld [vmem:[%s1 + $0x88] sm:$0xff]
        %v163 = vld [vmem:[%s1 + $0x90] sm:$0xff]
        %v164 = vld [vmem:[%s1 + $0x98] sm:$0xff]
        %v165 = vld [vmem:[%s1 + $0xa0] sm:$0xff]
        %v166 = vld [vmem:[%s1 + $0xa8] sm:$0xff]
        %v167 = vld [vmem:[%s1 + $0xb0] sm:$0xff]
        %v168 = vld [vmem:[%s1 + $0xb8] sm:$0xff]
        %v169 = vld [vmem:[%s1 + $0xc0] sm:$0xff]
        %v170 = vld [vmem:[%s1 + $0xc8] sm:$0xff]
        %v171 = vld [vmem:[%s1 + $0xd0] sm:$0xff]
        %v172 = vld [vmem:[%s1 + $0xd8] sm:$0xff]
        %v173 = vld [vmem:[%s1 + $0xe0] sm:$0xff]
        %v174 = vld [vmem:[%s1 + $0xe8] sm:$0xff]
        %v175 = vld [vmem:[%s1 + $0xf0] sm:$0xff]
        %v176 = vld [vmem:[%s1 + $0xf8] sm:$0xff]
        %v177 = vld [vmem:[%s1 + $0x100] sm:$0xff]
        %v178 = vld [vmem:[%s1 + $0x108] sm:$0xff]
        %v179 = vld [vmem:[%s1 + $0x110] sm:$0xff]
        %v180 = vld [vmem:[%s1 + $0x118] sm:$0xff]
        %v181 = vld [vmem:[%s1 + $0x120] sm:$0xff]
        %v182 = vld [vmem:[%s1 + $0x128] sm:$0xff]
        %v183 = vld [vmem:[%s1 + $0x130] sm:$0xff]
        %v184 = vld [vmem:[%s1 + $0x138] sm:$0xff]
        %v185 = vld [vmem:[%s1 + $0x140] sm:$0xff]
        %v186 = vld [vmem:[%s1 + $0x148] sm:$0xff]
        %v187 = vld [vmem:[%s1 + $0x150] sm:$0xff]
        %v188 = vld [vmem:[%s1 + $0x158] sm:$0xff]
        %v189 = vld [vmem:[%s1 + $0x160] sm:$0xff]
        %v190 = vld [vmem:[%s1 + $0x168] sm:$0xff]
        %v191 = vld [vmem:[%s1 + $0x170] sm:$0xff]
        %v192 = vld [vmem:[%s1 + $0x178] sm:$0xff]
        %193 = vmatprep.subr.mxu0 0.0
        %194 = vmatpush1.msra.mxu0 %v160
        %195 = vmatprep.subr.mxu0 0.0
        %196 = vmatpush1.msra.mxu0 %v159
        %197 = vmatprep.subr.mxu0 0.0
        %198 = vmatpush1.msra.mxu0 %v158
        %199 = vmatprep.subr.mxu0 0.0
        %200 = vmatpush1.msra.mxu0 %v157
        %201 = vmatprep.subr.mxu0 0.0
        %202 = vmatpush1.msra.mxu0 %v156
        %203 = vmatprep.subr.mxu0 0.0
        %204 = vmatpush1.msra.mxu0 %v155
        %205 = vmatprep.subr.mxu0 0.0
        %206 = vmatpush1.msra.mxu0 %v154
        %207 = vmatprep.subr.mxu0 0.0
        %208 = vmatpush1.msra.mxu0 %v153
        %209 = vmatprep.subr.mxu0 0.0
        %210 = vmatpush1.msra.mxu0 %v152
        %211 = vmatprep.subr.mxu0 0.0
        %212 = vmatpush1.msra.mxu0 %v151
        %213 = vmatprep.subr.mxu0 0.0
        %214 = vmatpush1.msra.mxu0 %v150
        %215 = vmatprep.subr.mxu0 0.0
        %216 = vmatpush1.msra.mxu0 %v149
        %217 = vmatprep.subr.mxu0 0.0
        %218 = vmatpush1.msra.mxu0 %v148
        %219 = vmatprep.subr.mxu0 0.0
        %220 = vmatpush1.msra.mxu0 %v147
        %221 = vmatprep.subr.mxu0 0.0
        %222 = vmatpush1.msra.mxu0 %v146
        %223 = vmatprep.subr.mxu0 0.0
        %224 = vmatpush1.msra.mxu0 %v145
        %225 = vmatprep.subr.mxu0 0.0
        %226 = vmatpush2.msra.mxu0 %v176
        %227 = vmatprep.subr.mxu0 0.0
        %228 = vmatpush2.msra.mxu0 %v175
        %229 = vmatprep.subr.mxu0 0.0
        %230 = vmatpush2.msra.mxu0 %v174
        %231 = vmatprep.subr.mxu0 0.0
        %232 = vmatpush2.msra.mxu0 %v173
        %233 = vmatprep.subr.mxu0 0.0
        %234 = vmatpush2.msra.mxu0 %v172
        %235 = vmatprep.subr.mxu0 0.0
        %236 = vmatpush2.msra.mxu0 %v171
        %237 = vmatprep.subr.mxu0 0.0
        %238 = vmatpush2.msra.mxu0 %v170
        %239 = vmatprep.subr.mxu0 0.0
        %240 = vmatpush2.msra.mxu0 %v169
        %241 = vmatprep.subr.mxu0 0.0
        %242 = vmatpush2.msra.mxu0 %v168
        %243 = vmatprep.subr.mxu0 0.0
        %244 = vmatpush2.msra.mxu0 %v167
        %245 = vmatprep.subr.mxu0 0.0
        %246 = vmatpush2.msra.mxu0 %v166
        %247 = vmatprep.subr.mxu0 0.0
        %248 = vmatpush2.msra.mxu0 %v165
        %249 = vmatprep.subr.mxu0 0.0
        %250 = vmatpush2.msra.mxu0 %v164
        %251 = vmatprep.subr.mxu0 0.0
        %252 = vmatpush2.msra.mxu0 %v163
        %253 = vmatprep.subr.mxu0 0.0
        %254 = vmatpush2.msra.mxu0 %v162
        %255 = vmatprep.subr.mxu0 0.0
        %256 = vmatpush2.msra.mxu0 %v161
        %257 = vmatprep.mubr.f32.mxu0 %v143
        %258 = vmatmul.mubr.f32.gmra.mxu0 %v142
        %v259 = vpop.f32.mrf.mxu0
        %v260 = vadd.f32 0.0, %v259
        %v261 = vpop.f32.mrf.mxu0
        %262 = vdwg.mxu0
        %263 = vmatprep.subr.mxu0 0.0
        %264 = vmatpush1.msra.mxu0 %v192
        %265 = vmatprep.subr.mxu0 0.0
        %266 = vmatpush1.msra.mxu0 %v191
        %267 = vmatprep.subr.mxu0 0.0
        %268 = vmatpush1.msra.mxu0 %v190
        %269 = vmatprep.subr.mxu0 0.0
        %270 = vmatpush1.msra.mxu0 %v189
        %271 = vmatprep.subr.mxu0 0.0
        %272 = vmatpush1.msra.mxu0 %v188
        %273 = vmatprep.subr.mxu0 0.0
        %274 = vmatpush1.msra.mxu0 %v187
        %275 = vmatprep.subr.mxu0 0.0
        %276 = vmatpush1.msra.mxu0 %v186
        %277 = vmatprep.subr.mxu0 0.0
        %278 = vmatpush1.msra.mxu0 %v185
        %279 = vmatprep.subr.mxu0 0.0
        %280 = vmatpush1.msra.mxu0 %v184
        %281 = vmatprep.subr.mxu0 0.0
        %282 = vmatpush1.msra.mxu0 %v183
        %283 = vmatprep.subr.mxu0 0.0
        %284 = vmatpush1.msra.mxu0 %v182
        %285 = vmatprep.subr.mxu0 0.0
        %286 = vmatpush1.msra.mxu0 %v181
        %287 = vmatprep.subr.mxu0 0.0
        %288 = vmatpush1.msra.mxu0 %v180
        %289 = vmatprep.subr.mxu0 0.0
        %290 = vmatpush1.msra.mxu0 %v179
        %291 = vmatprep.subr.mxu0 0.0
        %292 = vmatpush1.msra.mxu0 %v178
        %293 = vmatprep.subr.mxu0 0.0
        %294 = vmatpush1.msra.mxu0 %v177
        %295 = vmatprep.subr.mxu0 0.0
        %296 = vmatpush2.msra.mxu0 0.0
        %297 = vmatprep.subr.mxu0 0.0
        %298 = vmatpush2.msra.mxu0 0.0
        %299 = vmatprep.subr.mxu0 0.0
        %300 = vmatpush2.msra.mxu0 0.0
        %301 = vmatprep.subr.mxu0 0.0
        %302 = vmatpush2.msra.mxu0 0.0
        %303 = vmatprep.subr.mxu0 0.0
        %304 = vmatpush2.msra.mxu0 0.0
        %305 = vmatprep.subr.mxu0 0.0
        %306 = vmatpush2.msra.mxu0 0.0
        %307 = vmatprep.subr.mxu0 0.0
        %308 = vmatpush2.msra.mxu0 0.0
        %309 = vmatprep.subr.mxu0 0.0
        %310 = vmatpush2.msra.mxu0 0.0
        %311 = vmatprep.subr.mxu0 0.0
        %312 = vmatpush2.msra.mxu0 0.0
        %313 = vmatprep.subr.mxu0 0.0
        %314 = vmatpush2.msra.mxu0 0.0
        %315 = vmatprep.subr.mxu0 0.0
        %316 = vmatpush2.msra.mxu0 0.0
        %317 = vmatprep.subr.mxu0 0.0
        %318 = vmatpush2.msra.mxu0 0.0
        %319 = vmatprep.subr.mxu0 0.0
        %320 = vmatpush2.msra.mxu0 0.0
        %321 = vmatprep.subr.mxu0 0.0
        %322 = vmatpush2.msra.mxu0 0.0
        %323 = vmatprep.subr.mxu0 0.0
        %324 = vmatpush2.msra.mxu0 0.0
        %325 = vmatprep.subr.mxu0 0.0
        %326 = vmatpush2.msra.mxu0 0.0
        %327 = vmatprep.mubr.f32.mxu0 0.0
        %328 = vmatmul.mubr.f32.gmra.mxu0 %v144
        %v329 = vpop.f32.mrf.mxu0
        %v330 = vadd.f32 %v260, %v329
        %v331 = vpop.f32.mrf.mxu0
        %332 = vdwg.mxu0
        %vm333 = vcmask 392192
        %334 = vst.msk [vmem:[%s136] sm:$0xff] %vm333, %v330
        %s335 = sand.u32 %s71, 1
        %s336 = scalar_lea.sflag [#allocation3], %s335
        %s337 = sand.u32 %s71, 1
        %s338 = smul.addr %s337, 8
        %s339 = scalar_lea.vmem [#allocation2], %s338
        // Predicated region
        $region29: #{tpu_custom_call.1} parent=27 // pred_check
          %p340 = pneg %p81
        $region30: #{tpu_custom_call.1} parent=27 // pred_check_branch
          %342 = sbr.rel (%p340) target = $region32
        $region31: #{tpu_custom_call.1} parent=27 // pred_region
          %s344 = ssub.s32 128, 128
          %345 = vsyncadd %s336, %s344
          %s346 = smul.addr %s16, 128
          %s347 = scalar_lea.hbm %s2, %s346
          %s349 = sshll.u32 %s339, 4
          %s350 = int_to_ptr.vmem [resolvable:$true] %s349
          %352 = dma.vmem_to_hbm [thread:$0]  %s350, 128, %s347, %s336
        $region32: #{tpu_custom_call.1} parent=27 // pred_fallthru
          _
      $region28: #{tpu_custom_call.1} parent=5 // pred_fallthru
        _
      %p353 = scmp.le.s32.totalorder 2, %s11
      // Predicated region
      $region33: #{tpu_custom_call.1} parent=5 // pred_check
        %p354 = pneg %p353
      $region34: #{tpu_custom_call.1} parent=5 // pred_check_branch
        %356 = sbr.rel (%p354) target = $region36
      $region35: #{tpu_custom_call.1} parent=5 // pred_region
        %s357 = ssub.s32 %s11, 2
        // Predicated region
        $region37: #{tpu_custom_call.1} parent=35 // pred_check
          %p358 = pneg %p87
        $region38: #{tpu_custom_call.1} parent=35 // pred_check_branch
          %360 = sbr.rel (%p358) target = $region40
        $region39: #{tpu_custom_call.1} parent=35 // pred_region
          %s361 = sand.u32 %s72, 1
          %s362 = scalar_lea.sflag [#allocation3], %s361
          %s363 = sand.u32 %s72, 1
          %s364 = smul.addr %s363, 8
          %s365 = scalar_lea.vmem [#allocation2], %s364
          %366 = dma.done %s362, 128
        $region40: #{tpu_custom_call.1} parent=35 // pred_fallthru
          _
      $region36: #{tpu_custom_call.1} parent=5 // pred_fallthru
        _
    $region6: #{tpu_custom_call.1} parent=1 // loop_footer
      %s15 = sadd.s32 1, %s11
    $region7: #{tpu_custom_call.1} parent=1 // loop_footer_branch
      %10 = sbr.rel target = $region3
    $region8: #{tpu_custom_call.1} parent=1 // loop_exit
      _
    %367 = vsyncpa [#allocation3], 1
    %s368 = scalar_lea.sflag [#allocation3], 1
    %369 = vsyncpa %s368, 1

</llo_original>
